<compile_context>
chip_gen: v7x
topology: tpu7x:2x2x1
jax: 0.10.0
libtpu: 0.0.40
codegen_flags: <defaults>
</compile_context>

<pallas_src>
import jax
import jax.numpy as jnp
import numpy as np
from jax import lax
from jax.experimental import pallas as pl
from jax.experimental.pallas import tpu as pltpu


_SUBLANE_PACK = {4: 8, 2: 16, 1: 32}  # rows per sublane tile by itemsize


def _vmem_policy():
    """Return (vmem_limit_bytes, target_block_bytes) for the current TPU generation."""
    vmem = 64 << 20  # conservative default (v7x per-TC physical)
    try:
        info = pltpu.get_tpu_info()
        vmem = int(getattr(info, "vmem_capacity_bytes", vmem))
    except Exception:
        pass
    if vmem >= (96 << 20):
        # v5e / v6e: 128 MiB physical VMEM -> big blocks, generous scoped limit.
        return 64 << 20, 8 << 20
    # v7x: 64 MiB per TensorCore -> keep 4x(block) double-buffering well under limit.
    return 48 << 20, 4 << 20


def _pick_rows_per_block(nc, hw, itemsize, target_bytes, min_steps=8):
    """Rows per block: ~target_bytes blocks, sublane-pack aligned, grid kept long."""
    pack = _SUBLANE_PACK.get(itemsize, 8)
    rows = max(1, target_bytes // (hw * itemsize))
    # Keep >= min_steps grid steps so both v7x TCs get work and the pipeline fills.
    rows_cap = max(pack, -(-nc // min_steps))
    rows = min(rows, rows_cap)
    if rows >= nc:
        return nc                              # full-dim block: always legal
    rows = max(pack, (rows // pack) * pack)    # align to sublane packing
    return min(rows, nc)


def _make_kernel(hw_true):
    inv_n = np.float32(1.0 / hw_true)
    inv_nm1 = np.float32(1.0 / (hw_true - 1))

    def kernel(x_ref, gb_ref, o_ref):
        # x_ref: (rows, HW_pad) -- each row is one (n, c) spatial plane, lane-dense.
        x = x_ref[...].astype(jnp.float32)
        s = jnp.sum(x, axis=-1, keepdims=True)        # (rows, 1) f32 accumulation
        sq = jnp.sum(x * x, axis=-1, keepdims=True)   # (rows, 1)
        mean = s * inv_n
        var = (sq - s * mean) * inv_nm1               # unbiased (torch .std default)
        inv_std = lax.rsqrt(var)                      # EUP slot
        gb = gb_ref[...].astype(jnp.float32)          # (rows, 2): [gamma, beta]
        scale = gb[:, 0:1] * inv_std                  # gamma folded into 1/std
        shift = gb[:, 1:2] - mean * scale             # beta - mean*scale (per row)
        o_ref[...] = (x * scale + shift).astype(o_ref.dtype)

    return kernel


def conditional_instance_norm_2d(x, gammas, betas, *, donate_x=False):
    """x: (N, C, H, W); gammas, betas: (N, C, 1, 1). Returns (N, C, H, W)."""
    N, C, H, W = x.shape
    assert gammas.shape == (N, C, 1, 1) and betas.shape == (N, C, 1, 1)
    NC, HW = N * C, H * W
    assert HW > 1, "unbiased std needs H*W > 1"

    # NCHW-contiguous -> (NC, HW) is a free view; lane dim = HW.
    x2 = x.reshape(NC, HW)
    gb2 = jnp.concatenate(
        [gammas.reshape(NC, 1), betas.reshape(NC, 1)], axis=1
    )  # (NC, 2) packed gamma/beta -> one small DMA per grid step

    # Small-HW guard: keep stores lane-dense.
    HW_pad = HW
    if HW < 128:
        HW_pad = 128
        x2 = jnp.pad(x2, ((0, 0), (0, HW_pad - HW)))

    vmem_limit, target_bytes = _vmem_policy()
    rows = _pick_rows_per_block(NC, HW_pad, x.dtype.itemsize, target_bytes)
    grid = (pl.cdiv(NC, rows),)

    x_spec = pl.BlockSpec((rows, HW_pad), lambda i: (i, 0))
    gb_spec = pl.BlockSpec((rows, 2), lambda i: (i, 0))

    cost = pl.CostEstimate(
        flops=7 * NC * HW,
        transcendentals=NC,
        bytes_accessed=2 * NC * HW * x.dtype.itemsize,
    )

    # Optional in-place update when the caller donates x (no second HBM buffer).
    aliases = {0: 0} if (donate_x and HW_pad == HW) else {}

    out2 = pl.pallas_call(
        _make_kernel(HW),
        out_shape=jax.ShapeDtypeStruct((NC, HW_pad), x.dtype),
        grid_spec=pltpu.PrefetchScalarGridSpec(
            num_scalar_prefetch=0,
            grid=grid,
            in_specs=[x_spec, gb_spec],
            out_specs=x_spec,
        ),
        compiler_params=pltpu.CompilerParams(
            dimension_semantics=("parallel",),
            vmem_limit_bytes=vmem_limit,
        ),
        cost_estimate=cost,
        input_output_aliases=aliases,
    )(x2, gb2)

    if HW_pad != HW:
        out2 = out2[:, :HW]
    return out2.reshape(N, C, H, W)


def _reference(x, gammas, betas):
    mean = jnp.mean(x, axis=(2, 3), keepdims=True)
    var = jnp.sum((x - mean) ** 2, axis=(2, 3), keepdims=True) / (
        x.shape[2] * x.shape[3] - 1
    )
    std = jnp.sqrt(var)
    return (x - mean) / std * gammas + betas


if __name__ == "__main__":
    key = jax.random.PRNGKey(0)
    kx, kg, kb = jax.random.split(key, 3)

    N, C, H, W = 2, 4, 16, 16
    x = jax.random.normal(kx, (N, C, H, W), dtype=jnp.float32)
    gammas = jax.random.normal(kg, (N, C, 1, 1), dtype=jnp.float32)
    betas = jax.random.normal(kb, (N, C, 1, 1), dtype=jnp.float32)

    out = conditional_instance_norm_2d(x, gammas, betas)
    out = jax.block_until_ready(out)

    ref = jax.block_until_ready(_reference(x, gammas, betas))
    np.testing.assert_allclose(np.asarray(out), np.asarray(ref), rtol=1e-5, atol=1e-5)

    print("KERNEL_OK")
</pallas_src>

<mosaic_0001>
module attributes {stable_mosaic.version = 11 : i64} {
  func.func @kernel(%arg0: i32, %arg1: memref<8x256xf32, #tpu.memory_space<vmem>>, %arg2: memref<8x2xf32, #tpu.memory_space<vmem>>, %arg3: memref<8x256xf32, #tpu.memory_space<vmem>>) attributes {dimension_semantics = [#tpu.dimension_semantics<parallel>], iteration_bounds = array<i64: 1>, scalar_prefetch = 0 : i64, scratch_operands = 0 : i64, tpu.core_type = #tpu.core_type<tc>, window_params = [{transform_indices = @transform_0, window_bounds = array<i64: 8, 256>}, {transform_indices = @transform_1, window_bounds = array<i64: 8, 2>}, {transform_indices = @transform_2, window_bounds = array<i64: 8, 256>}]} {
    %c0 = arith.constant 0 : index
    %c0_0 = arith.constant 0 : index
    %0 = vector.load %arg1[%c0, %c0_0] : memref<8x256xf32, #tpu.memory_space<vmem>>, vector<8x256xf32>
    %cst = arith.constant dense<0.000000e+00> : vector<8xf32>
    %1 = vector.multi_reduction <add>, %0, %cst [1] : vector<8x256xf32> to vector<8xf32>
    %2 = vector.shape_cast %1 : vector<8xf32> to vector<8x1xf32>
    %3 = arith.mulf %0, %0 : vector<8x256xf32>
    %cst_1 = arith.constant dense<0.000000e+00> : vector<8xf32>
    %4 = vector.multi_reduction <add>, %3, %cst_1 [1] : vector<8x256xf32> to vector<8xf32>
    %5 = vector.shape_cast %4 : vector<8xf32> to vector<8x1xf32>
    %cst_2 = arith.constant 3.906250e-03 : f32
    %6 = vector.broadcast %cst_2 : f32 to vector<8x1xf32>
    %7 = arith.mulf %2, %6 : vector<8x1xf32>
    %8 = arith.mulf %2, %7 : vector<8x1xf32>
    %9 = arith.subf %5, %8 : vector<8x1xf32>
    %cst_3 = arith.constant 0.00392156886 : f32
    %10 = vector.broadcast %cst_3 : f32 to vector<8x1xf32>
    %11 = arith.mulf %9, %10 : vector<8x1xf32>
    %12 = math.rsqrt %11 : vector<8x1xf32>
    %c0_4 = arith.constant 0 : index
    %c0_5 = arith.constant 0 : index
    %13 = vector.load %arg2[%c0_4, %c0_5] : memref<8x2xf32, #tpu.memory_space<vmem>>, vector<8x2xf32>
    %14 = vector.extract_strided_slice %13 {offsets = [0, 0], sizes = [8, 1], strides = [1, 1]} : vector<8x2xf32> to vector<8x1xf32>
    %15 = arith.mulf %14, %12 : vector<8x1xf32>
    %16 = vector.extract_strided_slice %13 {offsets = [0, 1], sizes = [8, 1], strides = [1, 1]} : vector<8x2xf32> to vector<8x1xf32>
    %17 = arith.mulf %7, %15 : vector<8x1xf32>
    %18 = arith.subf %16, %17 : vector<8x1xf32>
    %19 = vector.broadcast %15 : vector<8x1xf32> to vector<8x256xf32>
    %20 = arith.mulf %0, %19 : vector<8x256xf32>
    %21 = vector.broadcast %18 : vector<8x1xf32> to vector<8x256xf32>
    %22 = arith.addf %20, %21 : vector<8x256xf32>
    %c0_6 = arith.constant 0 : index
    %c0_7 = arith.constant 0 : index
    %23 = vector.load %arg3[%c0_6, %c0_7] : memref<8x256xf32, #tpu.memory_space<vmem>>, vector<8x256xf32>
    tpu.vector_store %arg3[%c0_6, %c0_7], %22 {strides = array<i32>} : memref<8x256xf32, #tpu.memory_space<vmem>>, vector<8x256xf32>,
    return
  }
  func.func @transform_0(%arg0: i32) -> (i32, i32) {
    %c0_i32 = arith.constant 0 : i32
    %c0_i32_0 = arith.constant 0 : i32
    return %arg0, %c0_i32 : i32, i32
  }
  func.func @transform_1(%arg0: i32) -> (i32, i32) {
    %c0_i32 = arith.constant 0 : i32
    %c0_i32_0 = arith.constant 0 : i32
    return %arg0, %c0_i32 : i32, i32
  }
  func.func @transform_2(%arg0: i32) -> (i32, i32) {
    %c0_i32 = arith.constant 0 : i32
    %c0_i32_0 = arith.constant 0 : i32
    return %arg0, %c0_i32 : i32, i32
  }
}

</mosaic_0001>

<llo_original>
// kernel: tpu_custom_call.1
$region0: #{tpu_custom_call.1}
  #allocation0 [shape = 'u32[]', space=smem, size = 0x4, offset = 0x4, fixed_abs, tag = 'smem constant byte address 0x4 - core index']
  #allocation1 [shape = 'u32[144,128]{1,0:T(1,128)}', space=vmem, size = 0x12000, scoped, tag = 'internal scratch']
  %s0 = inlined_call_operand.hbm [shape: f32[8,256], index: 0, kind: input, shape index: {}]
  %s1 = inlined_call_operand.vmem [shape: f32[8,2], index: 1, kind: input, shape index: {}]
  %s2 = inlined_call_operand.hbm [shape: f32[8,256], index: 2, kind: output, shape index: {}]
  %s3 = sld [smem:[#allocation0]]
  $region22: #{tpu_custom_call.1} parent=0
    _
  %s5 = ssub.s32 1, %s3
  %s6 = scalar_select 0, %s5, %s3
  $region1: #{tpu_custom_call.1} parent=0
    #allocation2 [shape = 'u8[8192]{0}', space=vmem, size = 0x2000, scoped, tag = 'input window, operand 0, single buffered']
    #allocation3 [shape = 's32[1]{0}', space=sflag, size = 0x4, scoped, tag = 'scoped memory for tpu_custom_call.1']
    #allocation4 [shape = 's32[1]{0}', space=sflag, size = 0x4, scoped, tag = 'scoped memory for tpu_custom_call.1']
    #allocation5 [shape = 'u8[8192]{0}', space=vmem, size = 0x2000, scoped, tag = 'output window, operand 0, single buffered']
    %7 = vsyncpa [#allocation3], 0
    %8 = vsyncpa [#allocation4], 0
    // Predicated region
    $region2: #{tpu_custom_call.1} parent=1 // pred_check
      _
    $region3: #{tpu_custom_call.1} parent=1 // pred_check_branch
      %10 = sbr.rel (0) target = $region5
    $region4: #{tpu_custom_call.1} parent=1 // pred_region
      %s12 = ssub.s32 256, 256
      %13 = vsyncadd [#allocation3], %s12
      %s15 = sshll.u32 [#allocation2], 4
      %s16 = int_to_ptr.vmem [resolvable:$true] %s15
      %18 = dma.hbm_to_vmem [thread:$0]  %s0, 256, %s16, [#allocation3]
    $region5: #{tpu_custom_call.1} parent=1 // pred_fallthru
      _
    // Predicated region
    $region6: #{tpu_custom_call.1} parent=1 // pred_check
      _
    $region7: #{tpu_custom_call.1} parent=1 // pred_check_branch
      %20 = sbr.rel (0) target = $region9
    $region8: #{tpu_custom_call.1} parent=1 // pred_region
      _
    $region9: #{tpu_custom_call.1} parent=1 // pred_fallthru
      _
    // Predicated region
    $region10: #{tpu_custom_call.1} parent=1 // pred_check
      _
    $region11: #{tpu_custom_call.1} parent=1 // pred_check_branch
      %22 = sbr.rel (0) target = $region13
    $region12: #{tpu_custom_call.1} parent=1 // pred_region
      %23 = dma.done [#allocation3], 256
    $region13: #{tpu_custom_call.1} parent=1 // pred_fallthru
      _
    %v24 = vld [vmem:[#allocation2] sm:$0xff]
    %v25 = vld [vmem:[#allocation2 + $0x8] sm:$0xff]
    %v26 = vadd.f32 %v24, %v25
    %27 = vadd.xlane.f32.xlu0 %v26
    %v28 = vpop.xlane.xlu0 %27
    %v29 = vmul.f32 %v24, %v24
    %v30 = vmul.f32 %v25, %v25
    %v31 = vadd.f32 %v29, %v30
    %32 = vadd.xlane.f32.xlu0 %v31
    %v33 = vpop.xlane.xlu0 %32
    %v34 = vmul.f32 %v28, 0.00390625
    %v35 = vmul.f32 %v28, %v34
    %v36 = vsub.f32 %v33, %v35
    %v37 = vmul.f32 %v36, 0.003921569
    %v38 = vrsqrt.pop %v37
    %v39 = vld [vmem:[%s1] sm:$0xff]
    %v40 = vmul.f32 %v39, %v38
    %v41 = vmul.f32 %v34, %v40
    %43 = vrot.lane.b32.xlu0 %v41, 1
    %v44 = vpop.permute.xlu0 %43
    %v46 = vsub.f32 %v39, %v44
    %48 = vset.pattern.permute.xlu0 0
    %49 = vperm.xlu0 %48, %v40
    %v50 = vpop.permute.xlu0 %49
    %v52 = vmul.f32 %v24, %v50
    %v53 = vmul.f32 %v25, %v50
    %55 = vset.pattern.permute.xlu0 1
    %56 = vperm.xlu0 %55, %v46
    %v57 = vpop.permute.xlu0 %56
    %v59 = vadd.f32 %v52, %v57
    %v60 = vadd.f32 %v53, %v57
    %61 = vst [vmem:[#allocation5] sm:$0xff] %v59
    %62 = vst [vmem:[#allocation5 + $0x8] sm:$0xff] %v60
    // Predicated region
    $region14: #{tpu_custom_call.1} parent=1 // pred_check
      _
    $region15: #{tpu_custom_call.1} parent=1 // pred_check_branch
      %64 = sbr.rel (0) target = $region17
    $region16: #{tpu_custom_call.1} parent=1 // pred_region
      %s66 = ssub.s32 256, 256
      %67 = vsyncadd [#allocation4], %s66
      %s69 = sshll.u32 [#allocation5], 4
      %s70 = int_to_ptr.vmem [resolvable:$true] %s69
      %72 = dma.vmem_to_hbm [thread:$0]  %s70, 256, %s2, [#allocation4]
    $region17: #{tpu_custom_call.1} parent=1 // pred_fallthru
      _
    // Predicated region
    $region18: #{tpu_custom_call.1} parent=1 // pred_check
      _
    $region19: #{tpu_custom_call.1} parent=1 // pred_check_branch
      %74 = sbr.rel (0) target = $region21
    $region20: #{tpu_custom_call.1} parent=1 // pred_region
      %75 = dma.done [#allocation4], 256
    $region21: #{tpu_custom_call.1} parent=1 // pred_fallthru
      _
    %76 = vsyncpa [#allocation3], 1
    %77 = vsyncpa [#allocation4], 1

</llo_original>
